<compile_context>
chip_gen: v6e
topology: v6e:2x2x1
jax: 0.10.0
libtpu: 0.0.40
codegen_flags: <defaults>
</compile_context>

<pallas_src>
import jax
import jax.numpy as jnp
from jax import lax
from jax.experimental import pallas as pl
from jax.experimental.pallas import tpu as pltpu


# --------------------------------------------------------------------------
# helpers
# --------------------------------------------------------------------------
def _round_up(x, m):
    return ((x + m - 1) // m) * m


def _sublane_align(itemsize):
    # sublane packing: f32 -> 8 rows / vreg, bf16 -> 16, int8/fp8 -> 32
    return {4: 8, 2: 16, 1: 32}.get(itemsize, 8)


def _pick_tile_d1(d1, d2p, itemsize, align, target_block_bytes=4 << 20):
    """VMEM-bytes-aware D1 tile: the largest multiple of `align` whose
    (tile_d1, d2p) `values` block stays under `target_block_bytes` (so the
    double-buffered stream fits comfortably on v5e/v6e/v7x)."""
    row_bytes = max(1, d2p * itemsize)
    rows_by_bytes = max(align, (target_block_bytes // row_bytes) // align * align)
    return int(min(_round_up(max(d1, 1), align), rows_by_bytes))


def _vmem_limit(values_block_bytes, extra_bytes):
    est = 2 * values_block_bytes + extra_bytes + 4096
    # generous 2x headroom, but never below 16 MiB or above a v7x-safe 48 MiB
    return int(min(max(2 * est, 16 << 20), 48 << 20))


# --------------------------------------------------------------------------
# single-point kernel
# --------------------------------------------------------------------------
def _table_kernel(point_ref, sizes_ref, dim1_ref, dim2_ref, values_ref, out_ref,
                  w2_ref, sw2_ref, num_ref, sw1_ref):
    # point_ref : SMEM (2,)  f32   -- query point (p0, p1)
    # sizes_ref : SMEM (2,)  i32   -- real (D1, D2) before padding
    # dim1_ref  : VMEM (T, 1) f32  -- coord tile along axis 0
    # dim2_ref  : VMEM (1, D2p) f32
    # values_ref: VMEM (T, D2p)    -- table tile, native dtype (bf16 ok)
    # out_ref   : VMEM (1, 1) f32
    # w2_ref    : VMEM (1, D2p) f32 scratch -- hoisted, masked w2
    # sw2_ref, num_ref, sw1_ref : VMEM (1,1) f32 scratch
    i = pl.program_id(0)
    tile_d1 = dim1_ref.shape[0]

    @pl.when(i == 0)
    def _init():
        p1 = point_ref[1]
        col_ids = lax.broadcasted_iota(jnp.int32, w2_ref.shape, 1)
        w2 = 1.0 / ((dim2_ref[...] - p1) ** 2 + 1.0)            # (1, D2p)
        w2 = jnp.where(col_ids < sizes_ref[1], w2, 0.0)          # mask D2 pad
        w2_ref[...] = w2
        sw2_ref[...] = jnp.sum(w2, keepdims=True)
        num_ref[...] = jnp.zeros_like(num_ref)
        sw1_ref[...] = jnp.zeros_like(sw1_ref)

    p0 = point_ref[0]
    row_ids = i * tile_d1 + lax.broadcasted_iota(jnp.int32, (tile_d1, 1), 0)
    w1 = 1.0 / ((dim1_ref[...] - p0) ** 2 + 1.0)                 # (T, 1)
    w1 = jnp.where(row_ids < sizes_ref[0], w1, 0.0)              # mask D1 pad

    vals = values_ref[...].astype(jnp.float32)                   # upcast post-load
    row = jnp.sum(vals * w2_ref[...], axis=1, keepdims=True)     # (T, 1)
    num_ref[...] = num_ref[...] + jnp.sum(row * w1, keepdims=True)
    sw1_ref[...] = sw1_ref[...] + jnp.sum(w1, keepdims=True)

    @pl.when(i == pl.num_programs(0) - 1)
    def _finalize():
        out_ref[...] = num_ref[...] / (sw1_ref[...] * sw2_ref[...])


def table_forward(point, dim1, dim2, values, *, tile_d1=None,
                  target_block_bytes=4 << 20):
    """Pallas equivalent of table.forward(point). Returns a scalar float32."""
    d1, d2 = dim1.shape[0], dim2.shape[0]
    assert values.shape == (d1, d2)
    itemsize = jnp.dtype(values.dtype).itemsize
    align = _sublane_align(itemsize)

    d2p = _round_up(d2, 128)                     # lane-dense last dim
    if tile_d1 is None:
        tile_d1 = _pick_tile_d1(d1, d2p, itemsize, align, target_block_bytes)
    assert tile_d1 % align == 0, (tile_d1, align)
    d1p = _round_up(d1, tile_d1)
    grid = (d1p // tile_d1,)

    # One-time padding (in real use, pad the table at construction instead).
    dim1_p = jnp.pad(dim1.astype(jnp.float32), (0, d1p - d1)).reshape(d1p, 1)
    dim2_p = jnp.pad(dim2.astype(jnp.float32), (0, d2p - d2)).reshape(1, d2p)
    values_p = jnp.pad(values, ((0, d1p - d1), (0, d2p - d2)))

    sizes = jnp.array([d1, d2], dtype=jnp.int32)
    vmem_limit = _vmem_limit(tile_d1 * d2p * itemsize,
                             2 * tile_d1 * 4 + 3 * d2p * 4)

    out = pl.pallas_call(
        _table_kernel,
        out_shape=jax.ShapeDtypeStruct((1, 1), jnp.float32),
        grid=grid,
        in_specs=[
            pl.BlockSpec(memory_space=pltpu.SMEM),               # point (2,)
            pl.BlockSpec(memory_space=pltpu.SMEM),               # sizes (2,)
            pl.BlockSpec((tile_d1, 1), lambda i: (i, 0)),        # dim1 tile
            pl.BlockSpec((1, d2p), lambda i: (0, 0)),            # dim2 full row
            pl.BlockSpec((tile_d1, d2p), lambda i: (i, 0)),      # values tile
        ],
        out_specs=pl.BlockSpec((1, 1), lambda i: (0, 0)),
        scratch_shapes=[
            pltpu.VMEM((1, d2p), jnp.float32),                   # hoisted w2
            pltpu.VMEM((1, 1), jnp.float32),                     # sum(w2)
            pltpu.VMEM((1, 1), jnp.float32),                     # numerator
            pltpu.VMEM((1, 1), jnp.float32),                     # sum(w1)
        ],
        compiler_params=pltpu.CompilerParams(
            dimension_semantics=("arbitrary",),                  # D1 reduction
            vmem_limit_bytes=vmem_limit),
    )(point.astype(jnp.float32), sizes, dim1_p, dim2_p, values_p)
    return out[0, 0]


# --------------------------------------------------------------------------
# batched multi-point kernel (MXU path: values read from HBM once per batch)
# --------------------------------------------------------------------------
def _table_batched_kernel(sizes_ref, p0_ref, p1_ref, dim1_ref, dim2_ref,
                          values_ref, out_ref, acc_ref, sw1_ref):
    # sizes_ref : SMEM (2,) i32
    # p0_ref/p1_ref : VMEM (P, 1) f32
    # dim1_ref  : VMEM (1, T) f32   (T multiple of 128)
    # dim2_ref  : VMEM (1, D2p) f32
    # values_ref: VMEM (T, D2p)     native dtype
    # out_ref   : VMEM (P, 1) f32
    # acc_ref   : VMEM (P, D2p) f32 scratch (unnormalized W1 @ values)
    # sw1_ref   : VMEM (P, 1) f32 scratch
    i = pl.program_id(0)
    tile_d1 = dim1_ref.shape[1]

    @pl.when(i == 0)
    def _init():
        acc_ref[...] = jnp.zeros_like(acc_ref)
        sw1_ref[...] = jnp.zeros_like(sw1_ref)

    row_ids = i * tile_d1 + lax.broadcasted_iota(jnp.int32, (1, tile_d1), 1)
    w1 = 1.0 / ((dim1_ref[...] - p0_ref[...]) ** 2 + 1.0)        # (P, T)
    w1 = jnp.where(row_ids < sizes_ref[0], w1, 0.0)

    vals = values_ref[...].astype(jnp.float32)                   # (T, D2p)
    acc_ref[...] = acc_ref[...] + jnp.dot(
        w1, vals, preferred_element_type=jnp.float32)            # MXU
    sw1_ref[...] = sw1_ref[...] + jnp.sum(w1, axis=1, keepdims=True)

    @pl.when(i == pl.num_programs(0) - 1)
    def _finalize():
        col_ids = lax.broadcasted_iota(jnp.int32, dim2_ref.shape, 1)
        w2 = 1.0 / ((dim2_ref[...] - p1_ref[...]) ** 2 + 1.0)    # (P, D2p)
        w2 = jnp.where(col_ids < sizes_ref[1], w2, 0.0)
        num = jnp.sum(acc_ref[...] * w2, axis=1, keepdims=True)  # (P, 1)
        den = sw1_ref[...] * jnp.sum(w2, axis=1, keepdims=True)
        out_ref[...] = num / den


def table_forward_batched(points, dim1, dim2, values, *, tile_d1=None,
                          target_block_bytes=4 << 20):
    """Batched table.forward: points (P, 2) -> (P,) float32."""
    p_n = points.shape[0]
    d1, d2 = dim1.shape[0], dim2.shape[0]
    assert values.shape == (d1, d2)
    itemsize = jnp.dtype(values.dtype).itemsize

    d2p = _round_up(d2, 128)
    # dim1 is laid out along the lane axis here -> tile must be 128-aligned.
    if tile_d1 is None:
        tile_d1 = _pick_tile_d1(d1, d2p, itemsize, 128, target_block_bytes)
    assert tile_d1 % 128 == 0, tile_d1
    d1p = _round_up(d1, tile_d1)
    grid = (d1p // tile_d1,)

    dim1_p = jnp.pad(dim1.astype(jnp.float32), (0, d1p - d1)).reshape(1, d1p)
    dim2_p = jnp.pad(dim2.astype(jnp.float32), (0, d2p - d2)).reshape(1, d2p)
    values_p = jnp.pad(values, ((0, d1p - d1), (0, d2p - d2)))

    p0 = points[:, 0:1].astype(jnp.float32)
    p1 = points[:, 1:2].astype(jnp.float32)
    sizes = jnp.array([d1, d2], dtype=jnp.int32)
    vmem_limit = _vmem_limit(tile_d1 * d2p * itemsize,
                             2 * tile_d1 * 4 + 2 * d2p * 4
                             + p_n * d2p * 4 + 4 * p_n * 4)

    out = pl.pallas_call(
        _table_batched_kernel,
        out_shape=jax.ShapeDtypeStruct((p_n, 1), jnp.float32),
        grid=grid,
        in_specs=[
            pl.BlockSpec(memory_space=pltpu.SMEM),               # sizes
            pl.BlockSpec((p_n, 1), lambda i: (0, 0)),            # p0
            pl.BlockSpec((p_n, 1), lambda i: (0, 0)),            # p1
            pl.BlockSpec((1, tile_d1), lambda i: (0, i)),        # dim1 tile
            pl.BlockSpec((1, d2p), lambda i: (0, 0)),            # dim2 full
            pl.BlockSpec((tile_d1, d2p), lambda i: (i, 0)),      # values tile
        ],
        out_specs=pl.BlockSpec((p_n, 1), lambda i: (0, 0)),
        scratch_shapes=[
            pltpu.VMEM((p_n, d2p), jnp.float32),                 # acc = W1 @ V
            pltpu.VMEM((p_n, 1), jnp.float32),                   # sum(w1)
        ],
        compiler_params=pltpu.CompilerParams(
            dimension_semantics=("arbitrary",),
            vmem_limit_bytes=vmem_limit),
    )(sizes, p0, p1, dim1_p, dim2_p, values_p)
    return out[:, 0]


# --------------------------------------------------------------------------
# pure-JAX reference
# --------------------------------------------------------------------------
def table_forward_ref(point, dim1, dim2, values):
    w1 = 1.0 / ((dim1 - point[0]) ** 2 + 1.0)
    w1 = w1 / jnp.sum(w1)
    w2 = 1.0 / ((dim2 - point[1]) ** 2 + 1.0)
    w2 = w2 / jnp.sum(w2)
    mask = jnp.outer(w1, w2)
    return jnp.sum(mask * values.astype(jnp.float32))


if __name__ == "__main__":
    # Deliberately awkward sizes so the padding + masking + multi-tile
    # accumulator paths are all exercised. Values stream in bf16.
    D1, D2, P = 250, 500, 8
    key = jax.random.PRNGKey(0)
    k_vals, k_point, k_points = jax.random.split(key, 3)

    dim1 = jnp.linspace(0.0, 1.0, D1, dtype=jnp.float32)
    dim2 = jnp.linspace(0.0, 1.0, D2, dtype=jnp.float32)
    values = jax.random.normal(k_vals, (D1, D2), dtype=jnp.float32).astype(jnp.bfloat16)
    point = jax.random.uniform(k_point, (2,), dtype=jnp.float32)
    points = jax.random.uniform(k_points, (P, 2), dtype=jnp.float32)

    # single-point path (4 x 64-row tiles, bf16-aligned)
    out = jax.block_until_ready(table_forward(point, dim1, dim2, values, tile_d1=64))
    ref = table_forward_ref(point, dim1, dim2, values)
    assert jnp.allclose(out, ref, atol=1e-4, rtol=1e-4), (out, ref)

    # batched MXU path (2 x 128-row tiles)
    outs = jax.block_until_ready(
        table_forward_batched(points, dim1, dim2, values, tile_d1=128))
    refs = jax.vmap(lambda p: table_forward_ref(p, dim1, dim2, values))(points)
    assert jnp.allclose(outs, refs, atol=1e-4, rtol=1e-4), (outs, refs)

    print("KERNEL_OK")
</pallas_src>

<mosaic_0001>
module attributes {stable_mosaic.version = 11 : i64} {
  func.func @_table_kernel(%arg0: i32, %arg1: memref<2xf32, #tpu.memory_space<smem>>, %arg2: memref<2xi32, #tpu.memory_space<smem>>, %arg3: memref<64x1xf32, #tpu.memory_space<vmem>>, %arg4: memref<1x512xf32, #tpu.memory_space<vmem>>, %arg5: memref<64x512xbf16, #tpu.memory_space<vmem>>, %arg6: memref<1x1xf32, #tpu.memory_space<vmem>>, %arg7: memref<1x512xf32, #tpu.memory_space<vmem>>, %arg8: memref<1x1xf32, #tpu.memory_space<vmem>>, %arg9: memref<1x1xf32, #tpu.memory_space<vmem>>, %arg10: memref<1x1xf32, #tpu.memory_space<vmem>>) attributes {dimension_semantics = [#tpu.dimension_semantics<arbitrary>], iteration_bounds = array<i64: 4>, scalar_prefetch = 0 : i64, scratch_operands = 4 : i64, tpu.core_type = #tpu.core_type<tc>, window_params = [{transform_indices = @transform_0, window_bounds = array<i64: 2>}, {transform_indices = @transform_1, window_bounds = array<i64: 2>}, {transform_indices = @transform_2, window_bounds = array<i64: 64, 1>}, {pipeline_mode = #tpu.pipeline_mode<synchronous>, transform_indices = @transform_3, window_bounds = array<i64: 1, 512>}, {transform_indices = @transform_4, window_bounds = array<i64: 64, 512>}, {pipeline_mode = #tpu.pipeline_mode<synchronous>, transform_indices = @transform_5, window_bounds = array<i64: 1, 1>}]} {
    %c0_i32 = arith.constant 0 : i32
    %0 = arith.cmpi eq, %arg0, %c0_i32 : i32
    %1 = arith.extui %0 : i1 to i32
    %c0_i32_0 = arith.constant 0 : i32
    %2 = arith.cmpi ne, %1, %c0_i32_0 : i32
    scf.if %2 {
      %c1 = arith.constant 1 : index
      %48 = memref.load %arg1[%c1] : memref<2xf32, #tpu.memory_space<smem>>
      %49 = tpu.iota {dimensions = array<i32: 1>} : vector<1x512xi32>
      %c0_22 = arith.constant 0 : index
      %c0_23 = arith.constant 0 : index
      %50 = vector.load %arg4[%c0_22, %c0_23] : memref<1x512xf32, #tpu.memory_space<vmem>>, vector<1x512xf32>
      %51 = vector.broadcast %48 : f32 to vector<1x512xf32>
      %52 = arith.subf %50, %51 : vector<1x512xf32>
      %53 = arith.mulf %52, %52 : vector<1x512xf32>
      %cst_24 = arith.constant 1.000000e+00 : f32
      %54 = vector.broadcast %cst_24 : f32 to vector<1x512xf32>
      %55 = arith.addf %53, %54 : vector<1x512xf32>
      %cst_25 = arith.constant 1.000000e+00 : f32
      %56 = vector.broadcast %cst_25 : f32 to vector<1x512xf32>
      %57 = arith.divf %56, %55 : vector<1x512xf32>
      %c1_26 = arith.constant 1 : index
      %58 = memref.load %arg2[%c1_26] : memref<2xi32, #tpu.memory_space<smem>>
      %59 = vector.broadcast %58 : i32 to vector<1x512xi32>
      %60 = arith.cmpi slt, %49, %59 : vector<1x512xi32>
      %cst_27 = arith.constant 0.000000e+00 : f32
      %61 = vector.broadcast %cst_27 : f32 to vector<1x512xf32>
      %62 = arith.select %60, %57, %61 : vector<1x512xi1>, vector<1x512xf32>
      %c0_28 = arith.constant 0 : index
      %c0_29 = arith.constant 0 : index
      %63 = vector.load %arg7[%c0_28, %c0_29] : memref<1x512xf32, #tpu.memory_space<vmem>>, vector<1x512xf32>
      tpu.vector_store %arg7[%c0_28, %c0_29], %62 {strides = array<i32>} : memref<1x512xf32, #tpu.memory_space<vmem>>, vector<1x512xf32>,
      %64 = vector.shape_cast %62 : vector<1x512xf32> to vector<1x1x512xf32>
      %cst_30 = arith.constant dense<0.000000e+00> : vector<1xf32>
      %65 = vector.multi_reduction <add>, %64, %cst_30 [1, 2] : vector<1x1x512xf32> to vector<1xf32>
      %66 = vector.shape_cast %65 : vector<1xf32> to vector<1x1x1xf32>
      %67 = vector.extract %66[0, 0, 0] : f32 from vector<1x1x1xf32>
      %68 = vector.broadcast %67 : f32 to vector<1x1xf32>
      %c0_31 = arith.constant 0 : index
      %c0_32 = arith.constant 0 : index
      %69 = vector.load %arg8[%c0_31, %c0_32] : memref<1x1xf32, #tpu.memory_space<vmem>>, vector<1x1xf32>
      tpu.vector_store %arg8[%c0_31, %c0_32], %68 {strides = array<i32>} : memref<1x1xf32, #tpu.memory_space<vmem>>, vector<1x1xf32>,
      %cst_33 = arith.constant 0.000000e+00 : f32
      %70 = vector.broadcast %cst_33 : f32 to vector<1x1xf32>
      %c0_34 = arith.constant 0 : index
      %c0_35 = arith.constant 0 : index
      %71 = vector.load %arg9[%c0_34, %c0_35] : memref<1x1xf32, #tpu.memory_space<vmem>>, vector<1x1xf32>
      tpu.vector_store %arg9[%c0_34, %c0_35], %70 {strides = array<i32>} : memref<1x1xf32, #tpu.memory_space<vmem>>, vector<1x1xf32>,
      %cst_36 = arith.constant 0.000000e+00 : f32
      %72 = vector.broadcast %cst_36 : f32 to vector<1x1xf32>
      %c0_37 = arith.constant 0 : index
      %c0_38 = arith.constant 0 : index
      %73 = vector.load %arg10[%c0_37, %c0_38] : memref<1x1xf32, #tpu.memory_space<vmem>>, vector<1x1xf32>
      tpu.vector_store %arg10[%c0_37, %c0_38], %72 {strides = array<i32>} : memref<1x1xf32, #tpu.memory_space<vmem>>, vector<1x1xf32>,
    } else {
    }
    %c0 = arith.constant 0 : index
    %3 = memref.load %arg1[%c0] : memref<2xf32, #tpu.memory_space<smem>>
    %c64_i32 = arith.constant 64 : i32
    %4 = arith.muli %arg0, %c64_i32 : i32
    %5 = tpu.iota {dimensions = array<i32: 0>} : vector<64x1xi32>
    %6 = vector.broadcast %4 : i32 to vector<64x1xi32>
    %7 = arith.addi %6, %5 : vector<64x1xi32>
    %c0_1 = arith.constant 0 : index
    %c0_2 = arith.constant 0 : index
    %8 = vector.load %arg3[%c0_1, %c0_2] : memref<64x1xf32, #tpu.memory_space<vmem>>, vector<64x1xf32>
    %9 = vector.broadcast %3 : f32 to vector<64x1xf32>
    %10 = arith.subf %8, %9 : vector<64x1xf32>
    %11 = arith.mulf %10, %10 : vector<64x1xf32>
    %cst = arith.constant 1.000000e+00 : f32
    %12 = vector.broadcast %cst : f32 to vector<64x1xf32>
    %13 = arith.addf %11, %12 : vector<64x1xf32>
    %cst_3 = arith.constant 1.000000e+00 : f32
    %14 = vector.broadcast %cst_3 : f32 to vector<64x1xf32>
    %15 = arith.divf %14, %13 : vector<64x1xf32>
    %c0_4 = arith.constant 0 : index
    %16 = memref.load %arg2[%c0_4] : memref<2xi32, #tpu.memory_space<smem>>
    %17 = vector.broadcast %16 : i32 to vector<64x1xi32>
    %18 = arith.cmpi slt, %7, %17 : vector<64x1xi32>
    %cst_5 = arith.constant 0.000000e+00 : f32
    %19 = vector.broadcast %cst_5 : f32 to vector<64x1xf32>
    %20 = arith.select %18, %15, %19 : vector<64x1xi1>, vector<64x1xf32>
    %c0_6 = arith.constant 0 : index
    %c0_7 = arith.constant 0 : index
    %21 = vector.load %arg5[%c0_6, %c0_7] : memref<64x512xbf16, #tpu.memory_space<vmem>>, vector<64x512xbf16>
    %22 = arith.extf %21 : vector<64x512xbf16> to vector<64x512xf32>
    %c0_8 = arith.constant 0 : index
    %c0_9 = arith.constant 0 : index
    %23 = vector.load %arg7[%c0_8, %c0_9] : memref<1x512xf32, #tpu.memory_space<vmem>>, vector<1x512xf32>
    %24 = vector.broadcast %23 : vector<1x512xf32> to vector<64x512xf32>
    %25 = arith.mulf %22, %24 : vector<64x512xf32>
    %cst_10 = arith.constant dense<0.000000e+00> : vector<64xf32>
    %26 = vector.multi_reduction <add>, %25, %cst_10 [1] : vector<64x512xf32> to vector<64xf32>
    %27 = vector.shape_cast %26 : vector<64xf32> to vector<64x1xf32>
    %c0_11 = arith.constant 0 : index
    %c0_12 = arith.constant 0 : index
    %28 = vector.load %arg9[%c0_11, %c0_12] : memref<1x1xf32, #tpu.memory_space<vmem>>, vector<1x1xf32>
    %29 = arith.mulf %27, %20 : vector<64x1xf32>
    %30 = vector.shape_cast %29 : vector<64x1xf32> to vector<1x64x1xf32>
    %cst_13 = arith.constant dense<0.000000e+00> : vector<1xf32>
    %31 = vector.multi_reduction <add>, %30, %cst_13 [1, 2] : vector<1x64x1xf32> to vector<1xf32>
    %32 = vector.shape_cast %31 : vector<1xf32> to vector<1x1x1xf32>
    %33 = vector.extract %32[0, 0, 0] : f32 from vector<1x1x1xf32>
    %34 = vector.broadcast %33 : f32 to vector<1x1xf32>
    %35 = arith.addf %28, %34 : vector<1x1xf32>
    %c0_14 = arith.constant 0 : index
    %c0_15 = arith.constant 0 : index
    %36 = vector.load %arg9[%c0_14, %c0_15] : memref<1x1xf32, #tpu.memory_space<vmem>>, vector<1x1xf32>
    tpu.vector_store %arg9[%c0_14, %c0_15], %35 {strides = array<i32>} : memref<1x1xf32, #tpu.memory_space<vmem>>, vector<1x1xf32>,
    %c0_16 = arith.constant 0 : index
    %c0_17 = arith.constant 0 : index
    %37 = vector.load %arg10[%c0_16, %c0_17] : memref<1x1xf32, #tpu.memory_space<vmem>>, vector<1x1xf32>
    %38 = vector.shape_cast %20 : vector<64x1xf32> to vector<1x64x1xf32>
    %cst_18 = arith.constant dense<0.000000e+00> : vector<1xf32>
    %39 = vector.multi_reduction <add>, %38, %cst_18 [1, 2] : vector<1x64x1xf32> to vector<1xf32>
    %40 = vector.shape_cast %39 : vector<1xf32> to vector<1x1x1xf32>
    %41 = vector.extract %40[0, 0, 0] : f32 from vector<1x1x1xf32>
    %42 = vector.broadcast %41 : f32 to vector<1x1xf32>
    %43 = arith.addf %37, %42 : vector<1x1xf32>
    %c0_19 = arith.constant 0 : index
    %c0_20 = arith.constant 0 : index
    %44 = vector.load %arg10[%c0_19, %c0_20] : memref<1x1xf32, #tpu.memory_space<vmem>>, vector<1x1xf32>
    tpu.vector_store %arg10[%c0_19, %c0_20], %43 {strides = array<i32>} : memref<1x1xf32, #tpu.memory_space<vmem>>, vector<1x1xf32>,
    %c3_i32 = arith.constant 3 : i32
    %45 = arith.cmpi eq, %arg0, %c3_i32 : i32
    %46 = arith.extui %45 : i1 to i32
    %c0_i32_21 = arith.constant 0 : i32
    %47 = arith.cmpi ne, %46, %c0_i32_21 : i32
    scf.if %47 {
      %c0_22 = arith.constant 0 : index
      %c0_23 = arith.constant 0 : index
      %48 = vector.load %arg9[%c0_22, %c0_23] : memref<1x1xf32, #tpu.memory_space<vmem>>, vector<1x1xf32>
      %c0_24 = arith.constant 0 : index
      %c0_25 = arith.constant 0 : index
      %49 = vector.load %arg10[%c0_24, %c0_25] : memref<1x1xf32, #tpu.memory_space<vmem>>, vector<1x1xf32>
      %c0_26 = arith.constant 0 : index
      %c0_27 = arith.constant 0 : index
      %50 = vector.load %arg8[%c0_26, %c0_27] : memref<1x1xf32, #tpu.memory_space<vmem>>, vector<1x1xf32>
      %51 = arith.mulf %49, %50 : vector<1x1xf32>
      %52 = arith.divf %48, %51 : vector<1x1xf32>
      %c0_28 = arith.constant 0 : index
      %c0_29 = arith.constant 0 : index
      %53 = vector.load %arg6[%c0_28, %c0_29] : memref<1x1xf32, #tpu.memory_space<vmem>>, vector<1x1xf32>
      tpu.vector_store %arg6[%c0_28, %c0_29], %52 {strides = array<i32>} : memref<1x1xf32, #tpu.memory_space<vmem>>, vector<1x1xf32>,
    } else {
    }
    return
  }
  func.func @transform_0(%arg0: i32) -> i32 {
    %c0_i32 = arith.constant 0 : i32
    %c0_i32_0 = arith.constant 0 : i32
    return %c0_i32 : i32
  }
  func.func @transform_1(%arg0: i32) -> i32 {
    %c0_i32 = arith.constant 0 : i32
    %c0_i32_0 = arith.constant 0 : i32
    return %c0_i32 : i32
  }
  func.func @transform_2(%arg0: i32) -> (i32, i32) {
    %c0_i32 = arith.constant 0 : i32
    %c0_i32_0 = arith.constant 0 : i32
    return %arg0, %c0_i32 : i32, i32
  }
  func.func @transform_3(%arg0: i32) -> (i32, i32) {
    %c0_i32 = arith.constant 0 : i32
    %c0_i32_0 = arith.constant 0 : i32
    %c0_i32_1 = arith.constant 0 : i32
    return %c0_i32, %c0_i32_0 : i32, i32
  }
  func.func @transform_4(%arg0: i32) -> (i32, i32) {
    %c0_i32 = arith.constant 0 : i32
    %c0_i32_0 = arith.constant 0 : i32
    return %arg0, %c0_i32 : i32, i32
  }
  func.func @transform_5(%arg0: i32) -> (i32, i32) {
    %c0_i32 = arith.constant 0 : i32
    %c0_i32_0 = arith.constant 0 : i32
    %c0_i32_1 = arith.constant 0 : i32
    return %c0_i32, %c0_i32_0 : i32, i32
  }
}

</mosaic_0001>

<llo_original>
// kernel: tpu_custom_call.1
$region0: #{tpu_custom_call.1}
  #allocation0 [shape = 'u32[]', space=smem, size = 0x4, offset = 0x4, fixed_abs, tag = 'smem constant byte address 0x4 - core index']
  #allocation1 [shape = 'u32[144,128]{1,0:T(1,128)}', space=vmem, size = 0x12000, scoped, tag = 'internal scratch']
  #allocation2 [shape = 'f32[1,512]{1,0:T(1,128)}', space=vmem, size = 0x800, scoped, tag = 'scratch operand']
  #allocation3 [shape = 'f32[1,1]{1,0:T(1,128)}', space=vmem, size = 0x200, scoped, tag = 'scratch operand']
  #allocation4 [shape = 'f32[1,1]{1,0:T(1,128)}', space=vmem, size = 0x200, scoped, tag = 'scratch operand']
  #allocation5 [shape = 'f32[1,1]{1,0:T(1,128)}', space=vmem, size = 0x200, scoped, tag = 'scratch operand']
  %s0 = inlined_call_operand.vmem [shape: f32[2], index: 0, kind: input, shape index: {}]
  %s1 = inlined_call_operand.vmem [shape: s32[2], index: 1, kind: input, shape index: {}]
  %s2 = inlined_call_operand.vmem [shape: f32[256,1], index: 2, kind: input, shape index: {}]
  %s3 = inlined_call_operand.vmem [shape: f32[1,512], index: 3, kind: input, shape index: {}]
  %s4 = inlined_call_operand.hbm [shape: bf16[256,512], index: 4, kind: input, shape index: {}]
  %s5 = inlined_call_operand.hbm [shape: f32[1,1], index: 5, kind: output, shape index: {}]
  %s6 = sld [smem:[#allocation0]]
  $region73: #{tpu_custom_call.1} parent=0
    _
  %s8 = ssub.s32 1, %s6
  %s9 = scalar_select 0, %s8, %s6
  $region1: #{tpu_custom_call.1} parent=0
    #allocation6 [shape = 'u8[512]{0}', space=smem, size = 0x200, scoped, tag = 'input window, operand 0, single buffered']
    #allocation7 [shape = 's32[2]{0}', space=sflag, size = 0x8, scoped, tag = 'scoped memory for tpu_custom_call.1']
    #allocation8 [shape = 's32[2]{0}', space=sflag, size = 0x8, scoped, tag = 'scoped memory for tpu_custom_call.1']
    #allocation9 [shape = 's32[2]{0}', space=sflag, size = 0x8, scoped, tag = 'scoped memory for tpu_custom_call.1']
    #allocation10 [shape = 'u8[512]{0}', space=smem, size = 0x200, scoped, tag = 'input window, operand 1, single buffered']
    #allocation11 [shape = 's32[1]{0}', space=sflag, size = 0x4, scoped, tag = 'scoped memory for tpu_custom_call.1']
    #allocation12 [shape = 'u8[131072]{0}', space=vmem, size = 0x20000, scoped, tag = 'input window, operand 4']
    #allocation13 [shape = 'u8[512]{0}', space=vmem, size = 0x400, scoped, tag = 'output window, operand 0, single buffered']
    %10 = vsyncpa [#allocation9], 0
    %11 = vsyncpa [#allocation11], 0
    %12 = vsyncpa [#allocation7], 0
    %s13 = scalar_lea.sflag [#allocation7], 1
    %14 = vsyncpa %s13, 0
    %15 = vsyncpa [#allocation8], 0
    loop: start=0, step=1, limit=6
    $region2: #{tpu_custom_call.1} parent=1 // loop_pre_header
      _
    $region3: #{tpu_custom_call.1} parent=1 // loop_header
      %s17 = sphi 0, %s21
      %p18 = scmp.ge.s32.totalorder %s17, 6
      %s25 = sphi 0, %s25
      %s27 = sphi 0, %s25
      %s28 = sphi 0, %s27
      %s42 = sphi 0, %s28
      %s46 = sphi 0, %s46
      %s48 = sphi 0, %s46
      %s49 = sphi 0, %s48
      %s63 = sphi 0, %s49
      %s69 = sphi 0, %s71
      %s72 = sphi 0, %s69
      %s73 = sphi 0, %s72
      %s89 = sphi 0, %s73
      %s93 = sphi 0, %s93
      %s95 = sphi 0, %s93
      %s96 = sphi 0, %s95
      %s110 = sphi 0, %s96
      %s116 = sphi 0, %s118
      %s119 = sphi 0, %s116
      %s120 = sphi 0, %s119
      %s136 = sphi 0, %s120
      %s140 = sphi 0, %s140
      %s142 = sphi 0, %s140
      %s143 = sphi 0, %s142
      %s157 = sphi 0, %s143
    $region4: #{tpu_custom_call.1} parent=1 // loop_header_branch
      %20 = sbr.rel (%p18) target = $region8
    $region5: #{tpu_custom_call.1} parent=1 // loop_body
      %s22 = ssub.s32 %s17, 1
      %s23 = ssub.s32 %s17, 2
      %s24 = sadd.s32 %s17, 1
      %s26 = sadd.s32 %s25, 1
      %p29 = scmp.eq.s32.totalorder %s17, 3
      %p30 = scmp.ne.s32.totalorder %s25, %s27
      %p31 = scmp.eq.s32.totalorder %s17, 0
      %p32 = por %p30, %p31
      %p33 = scmp.ne.s32.totalorder %s25, %s27
      %p34 = scmp.eq.s32.totalorder %s22, 3
      %p35 = por %p33, %p34
      %p36 = scmp.ne.s32.totalorder %s27, %s28
      %p37 = scmp.eq.s32.totalorder %s22, 0
      %p38 = por %p36, %p37
      %p39 = scmp.ne.s32.totalorder %s27, %s28
      %p40 = scmp.eq.s32.totalorder %s23, 3
      %p41 = por %p39, %p40
      %p43 = scmp.ne.s32.totalorder %s28, %s42
      %p44 = scmp.eq.s32.totalorder %s23, 0
      %p45 = por %p43, %p44
      %s47 = sadd.s32 %s46, 1
      %p50 = scmp.eq.s32.totalorder %s17, 3
      %p51 = scmp.ne.s32.totalorder %s46, %s48
      %p52 = scmp.eq.s32.totalorder %s17, 0
      %p53 = por %p51, %p52
      %p54 = scmp.ne.s32.totalorder %s46, %s48
      %p55 = scmp.eq.s32.totalorder %s22, 3
      %p56 = por %p54, %p55
      %p57 = scmp.ne.s32.totalorder %s48, %s49
      %p58 = scmp.eq.s32.totalorder %s22, 0
      %p59 = por %p57, %p58
      %p60 = scmp.ne.s32.totalorder %s48, %s49
      %p61 = scmp.eq.s32.totalorder %s23, 3
      %p62 = por %p60, %p61
      %p64 = scmp.ne.s32.totalorder %s49, %s63
      %p65 = scmp.eq.s32.totalorder %s23, 0
      %p66 = por %p64, %p65
      %s67 = ssub.s32 %s17, %s24
      %p68 = scmp.eq.s32.totalorder %s67, 0
      %s70 = sadd.s32 %s69, 1
      %s71 = scalar_select %p68, %s69, %s70
      %p74 = pneg %p68
      %p75 = scmp.eq.s32.totalorder %s17, 3
      %p76 = por %p74, %p75
      %p77 = scmp.ne.s32.totalorder %s69, %s72
      %p78 = scmp.eq.s32.totalorder %s17, 0
      %p79 = por %p77, %p78
      %p80 = scmp.ne.s32.totalorder %s69, %s72
      %p81 = scmp.eq.s32.totalorder %s22, 3
      %p82 = por %p80, %p81
      %p83 = scmp.ne.s32.totalorder %s72, %s73
      %p84 = scmp.eq.s32.totalorder %s22, 0
      %p85 = por %p83, %p84
      %p86 = scmp.ne.s32.totalorder %s72, %s73
      %p87 = scmp.eq.s32.totalorder %s23, 3
      %p88 = por %p86, %p87
      %p90 = scmp.ne.s32.totalorder %s73, %s89
      %p91 = scmp.eq.s32.totalorder %s23, 0
      %p92 = por %p90, %p91
      %s94 = sadd.s32 %s93, 1
      %p97 = scmp.eq.s32.totalorder %s17, 3
      %p98 = scmp.ne.s32.totalorder %s93, %s95
      %p99 = scmp.eq.s32.totalorder %s17, 0
      %p100 = por %p98, %p99
      %p101 = scmp.ne.s32.totalorder %s93, %s95
      %p102 = scmp.eq.s32.totalorder %s22, 3
      %p103 = por %p101, %p102
      %p104 = scmp.ne.s32.totalorder %s95, %s96
      %p105 = scmp.eq.s32.totalorder %s22, 0
      %p106 = por %p104, %p105
      %p107 = scmp.ne.s32.totalorder %s95, %s96
      %p108 = scmp.eq.s32.totalorder %s23, 3
      %p109 = por %p107, %p108
      %p111 = scmp.ne.s32.totalorder %s96, %s110
      %p112 = scmp.eq.s32.totalorder %s23, 0
      %p113 = por %p111, %p112
      %s114 = ssub.s32 %s17, %s24
      %p115 = scmp.eq.s32.totalorder %s114, 0
      %s117 = sadd.s32 %s116, 1
      %s118 = scalar_select %p115, %s116, %s117
      %p121 = pneg %p115
      %p122 = scmp.eq.s32.totalorder %s17, 3
      %p123 = por %p121, %p122
      %p124 = scmp.ne.s32.totalorder %s116, %s119
      %p125 = scmp.eq.s32.totalorder %s17, 0
      %p126 = por %p124, %p125
      %p127 = scmp.ne.s32.totalorder %s116, %s119
      %p128 = scmp.eq.s32.totalorder %s22, 3
      %p129 = por %p127, %p128
      %p130 = scmp.ne.s32.totalorder %s119, %s120
      %p131 = scmp.eq.s32.totalorder %s22, 0
      %p132 = por %p130, %p131
      %p133 = scmp.ne.s32.totalorder %s119, %s120
      %p134 = scmp.eq.s32.totalorder %s23, 3
      %p135 = por %p133, %p134
      %p137 = scmp.ne.s32.totalorder %s120, %s136
      %p138 = scmp.eq.s32.totalorder %s23, 0
      %p139 = por %p137, %p138
      %s141 = sadd.s32 %s140, 1
      %p144 = scmp.eq.s32.totalorder %s17, 3
      %p145 = scmp.ne.s32.totalorder %s140, %s142
      %p146 = scmp.eq.s32.totalorder %s17, 0
      %p147 = por %p145, %p146
      %p148 = scmp.ne.s32.totalorder %s140, %s142
      %p149 = scmp.eq.s32.totalorder %s22, 3
      %p150 = por %p148, %p149
      %p151 = scmp.ne.s32.totalorder %s142, %s143
      %p152 = scmp.eq.s32.totalorder %s22, 0
      %p153 = por %p151, %p152
      %p154 = scmp.ne.s32.totalorder %s142, %s143
      %p155 = scmp.eq.s32.totalorder %s23, 3
      %p156 = por %p154, %p155
      %p158 = scmp.ne.s32.totalorder %s143, %s157
      %p159 = scmp.eq.s32.totalorder %s23, 0
      %p160 = por %p158, %p159
      %p161 = scmp.le.s32.totalorder 1, %s17
      %p162 = scmp.lt.s32.totalorder %s17, 5
      %p163 = pnand %p161, %p162
      %p164 = pneg %p163
      // Predicated region
      $region9: #{tpu_custom_call.1} parent=5 // pred_check
        _
      $region10: #{tpu_custom_call.1} parent=5 // pred_check_branch
        %166 = sbr.rel (%p163) target = $region12
      $region11: #{tpu_custom_call.1} parent=5 // pred_region
        %s167 = ssub.s32 %s17, 1
        // Predicated region
        $region13: #{tpu_custom_call.1} parent=11 // pred_check
          %p168 = pneg %p38
        $region14: #{tpu_custom_call.1} parent=11 // pred_check_branch
          %170 = sbr.rel (%p168) target = $region16
        $region15: #{tpu_custom_call.1} parent=11 // pred_region
          %s172 = ssub.s32 16, 16
          %173 = vsyncadd [#allocation9], %s172
          %s175 = sshll.u32 %s0, 4
          %s176 = int_to_ptr.vmem [resolvable:$true] %s175
          %178 = dma.vmem_to_smem %s176, 16, [#allocation6], [#allocation9]
        $region16: #{tpu_custom_call.1} parent=11 // pred_fallthru
          _
        // Predicated region
        $region17: #{tpu_custom_call.1} parent=11 // pred_check
          %p179 = pneg %p59
        $region18: #{tpu_custom_call.1} parent=11 // pred_check_branch
          %181 = sbr.rel (%p179) target = $region20
        $region19: #{tpu_custom_call.1} parent=11 // pred_region
          %s183 = ssub.s32 16, 16
          %184 = vsyncadd [#allocation11], %s183
          %s186 = sshll.u32 %s1, 4
          %s187 = int_to_ptr.vmem [resolvable:$true] %s186
          %189 = dma.vmem_to_smem %s187, 16, [#allocation10], [#allocation11]
        $region20: #{tpu_custom_call.1} parent=11 // pred_fallthru
          _
        // Predicated region
        $region21: #{tpu_custom_call.1} parent=11 // pred_check
          %p190 = pneg %p106
        $region22: #{tpu_custom_call.1} parent=11 // pred_check_branch
          %192 = sbr.rel (%p190) target = $region24
        $region23: #{tpu_custom_call.1} parent=11 // pred_region
          _
        $region24: #{tpu_custom_call.1} parent=11 // pred_fallthru
          _
      $region12: #{tpu_custom_call.1} parent=5 // pred_fallthru
        _
      %p193 = scmp.lt.s32.totalorder %s17, 4
      // Predicated region
      $region25: #{tpu_custom_call.1} parent=5 // pred_check
        %p194 = pneg %p193
      $region26: #{tpu_custom_call.1} parent=5 // pred_check_branch
        %196 = sbr.rel (%p194) target = $region28
      $region27: #{tpu_custom_call.1} parent=5 // pred_region
        // Predicated region
        $region29: #{tpu_custom_call.1} parent=27 // pred_check
          %p197 = pneg %p79
        $region30: #{tpu_custom_call.1} parent=27 // pred_check_branch
          %199 = sbr.rel (%p197) target = $region32
        $region31: #{tpu_custom_call.1} parent=27 // pred_region
          %s200 = smul.u32 8, %s17
          %p201 = scmp.lt.s32.totalorder %s200, 31
          %s202 = scalar_select %p201, %s200, 31
          %s203 = smul.addr %s202, 8
          %s204 = scalar_lea.vmem %s2, %s203
          %s205 = smul.u32 8, %s17
        $region32: #{tpu_custom_call.1} parent=27 // pred_fallthru
          _
        // Predicated region
        $region33: #{tpu_custom_call.1} parent=27 // pred_check
          %p206 = pneg %p126
        $region34: #{tpu_custom_call.1} parent=27 // pred_check_branch
          %208 = sbr.rel (%p206) target = $region36
        $region35: #{tpu_custom_call.1} parent=27 // pred_region
          %s209 = sand.u32 %s116, 1
          %s210 = scalar_lea.sflag [#allocation7], %s209
          %s211 = sand.u32 %s116, 1
          %s212 = smul.addr %s211, 128
          %s213 = scalar_lea.vmem [#allocation12], %s212
          %s214 = smul.u32 8, %s17
          %s216 = ssub.s32 2048, 2048
          %217 = vsyncadd %s210, %s216
          %s218 = smul.addr %s214, 4
          %s219 = smul.addr %s218, 64
          %s220 = scalar_lea.hbm %s4, %s219
          %s221 = sshll.u32 %s213, 4
          %s222 = int_to_ptr.vmem [resolvable:$true] %s221
          %227 = dma.hbm_to_vmem [thread:$0]  %s220, 2048, %s222, %s210, 256, 256, 16
        $region36: #{tpu_custom_call.1} parent=27 // pred_fallthru
          _
      $region28: #{tpu_custom_call.1} parent=5 // pred_fallthru
        _
      %p228 = scmp.le.s32.totalorder 1, %s17
      %p229 = scmp.lt.s32.totalorder %s17, 5
      %p230 = pnand %p228, %p229
      %p231 = pneg %p230
      // Predicated region
      $region37: #{tpu_custom_call.1} parent=5 // pred_check
        _
      $region38: #{tpu_custom_call.1} parent=5 // pred_check_branch
        %233 = sbr.rel (%p230) target = $region40
      $region39: #{tpu_custom_call.1} parent=5 // pred_region
        %s234 = ssub.s32 %s17, 1
        // Predicated region
        $region41: #{tpu_custom_call.1} parent=39 // pred_check
          %p235 = pneg %p38
        $region42: #{tpu_custom_call.1} parent=39 // pred_check_branch
          %237 = sbr.rel (%p235) target = $region44
        $region43: #{tpu_custom_call.1} parent=39 // pred_region
          %238 = dma.done [#allocation9], 16
        $region44: #{tpu_custom_call.1} parent=39 // pred_fallthru
          _
        // Predicated region
        $region45: #{tpu_custom_call.1} parent=39 // pred_check
          %p239 = pneg %p59
        $region46: #{tpu_custom_call.1} parent=39 // pred_check_branch
          %241 = sbr.rel (%p239) target = $region48
        $region47: #{tpu_custom_call.1} parent=39 // pred_region
          %242 = dma.done [#allocation11], 16
        $region48: #{tpu_custom_call.1} parent=39 // pred_fallthru
          _
        %s243 = sand.u32 %s119, 1
        %s244 = scalar_lea.sflag [#allocation7], %s243
        %s245 = sand.u32 %s119, 1
        %s246 = smul.addr %s245, 128
        %s247 = scalar_lea.vmem [#allocation12], %s246
        // Predicated region
        $region49: #{tpu_custom_call.1} parent=39 // pred_check
          %p248 = pneg %p132
        $region50: #{tpu_custom_call.1} parent=39 // pred_check_branch
          %250 = sbr.rel (%p248) target = $region52
        $region51: #{tpu_custom_call.1} parent=39 // pred_region
          %251 = dma.done %s244, 2048
        $region52: #{tpu_custom_call.1} parent=39 // pred_fallthru
          _
        %252 = sfence
        %p253 = pneg %p38
        %p254 = pneg %p35
        %p255 = pneg %p59
        %p256 = pneg %p56
        %s257 = smul.u32 8, %s22
        %p258 = scmp.lt.s32.totalorder %s257, 31
        %s259 = scalar_select %p258, %s257, 31
        %s260 = smul.addr %s259, 8
        %s261 = scalar_lea.vmem %s2, %s260
        %p262 = pneg %p85
        %p263 = pneg %p82
        %p264 = pneg %p106
        %p265 = pneg %p103
        %s266 = sand.u32 %s119, 1
        %s267 = scalar_lea.sflag [#allocation7], %s266
        %s268 = sand.u32 %s119, 1
        %s269 = smul.addr %s268, 128
        %s270 = scalar_lea.vmem [#allocation12], %s269
        %p271 = pneg %p132
        %p272 = pneg %p129
        %p273 = pneg %p153
        %p274 = pneg %p150
        %s275 = smul.u32 8, %s22
        %p276 = scmp.lt.s32.totalorder %s275, 31
        %s277 = scalar_select %p276, %s275, 31
        %s278 = smul.addr %s277, 8
        %s279 = scalar_lea.vmem %s2, %s278
        %s280 = smul.u32 8, %s22
        %s281 = smul.u32 8, %s22
        %p282 = scmp.eq.s32.totalorder %s22, 0
        // Predicated region
        $region53: #{tpu_custom_call.1} parent=39 // pred_check
          %p283 = pneg %p282
        $region54: #{tpu_custom_call.1} parent=39 // pred_check_branch
          %285 = sbr.rel (%p283) target = $region56
        $region55: #{tpu_custom_call.1} parent=39 // pred_region
          %s286 = sld [smem:[#allocation6 + $0x1]]
          %v287 = vlaneseq
          %v288 = vand.u32 %v287, 127
          %v289 = vadd.s32 %v288, 128
          %v290 = vadd.s32 %v288, 256
          %v291 = vadd.s32 %v288, 384
          %v292 = vld [vmem:[%s3] sm:$0xf]
          %v293 = vstv %s286
          %v294 = vsub.f32 %v292, %v293
          %v295 = vmul.f32 %v294, %v294
          %v296 = vadd.f32 %v295, 1.0
          %v297 = vrcp.pop %v296
          %v298 = vmul.f32 1.0, %v297
          %s299 = sld [smem:[#allocation10 + $0x1]]
          %v300 = vstv %s299
          %vm301 = vcmp.lt.s32.totalorder %v288, %v300
          %vm302 = vcmp.lt.s32.totalorder %v289, %v300
          %vm303 = vcmp.lt.s32.totalorder %v290, %v300
          %vm304 = vcmp.lt.s32.totalorder %v291, %v300
          %v306 = vlaneseq
          %v307 = vshrl.u32 %v306, 7
          %v308 = vsub.s32 0, %v307
          %v309 = vrot.slane %v298, %v308
          %v310 = vlaneseq
          %v311 = vshrl.u32 %v310, 7
          %v312 = vsub.s32 1, %v311
          %v313 = vrot.slane %v298, %v312
          %v314 = vlaneseq
          %v315 = vshrl.u32 %v314, 7
          %v316 = vsub.s32 2, %v315
          %v317 = vrot.slane %v298, %v316
          %v318 = vlaneseq
          %v319 = vshrl.u32 %v318, 7
          %v320 = vsub.s32 3, %v319
          %v321 = vrot.slane %v298, %v320
          %v326 = vsel %vm301, %v309, 0.0
          %v327 = vsel %vm302, %v313, 0.0
          %v328 = vsel %vm303, %v317, 0.0
          %v329 = vsel %vm304, %v321, 0.0
          %v334 = vcombine.low %v326, %v327
          %v335 = vcombine.low %v328, %v329
          %v337 = vunpack.c.l.s4 1966171168
          %v338 = vunpack.c.0.s8 %v337
          %v339 = vlaneseq
          %v340 = vshrl.u32 %v339, 7
          %v341 = vsub.s32 %v338, %v340
          %v342 = vrot.slane %v334, %v341
          %v344 = vunpack.c.l.s4 1966171168
          %v345 = vunpack.c.0.s8 %v344
          %v346 = vlaneseq
          %v347 = vshrl.u32 %v346, 7
          %v348 = vsub.s32 %v345, %v347
          %v349 = vrot.slane %v335, %v348
          %v350 = vcombine.low %v342, %v349
          %v352 = vunpack.c.l.s4 1966171168
          %v353 = vunpack.c.0.s8 %v352
          %v354 = vlaneseq
          %v355 = vshrl.u32 %v354, 7
          %v356 = vsub.s32 %v353, %v355
          %v357 = vrot.slane %v350, %v356
          %v359 = vlaneseq
          %vm360 = vcmp.ge.s32.totalorder %v359, 0
          %vm361 = vcmp.lt.s32.totalorder %v359, 512
          %vm362 = vmand %vm360, %vm361
          %363 = vst.msk [vmem:[#allocation2] sm:$0xf] %vm362, %v357
          %vm364 = vcmask 1040384
          %v365 = vsel %vm364, %v326, 0.0
          %v366 = vsel %vm364, %v327, 0.0
          %v367 = vadd.f32 %v365, %v366
          %v368 = vsel %vm364, %v328, 0.0
          %v369 = vadd.f32 %v367, %v368
          %v370 = vsel %vm364, %v329, 0.0
          %v371 = vadd.f32 %v369, %v370
          %372 = vadd.xlane.f32.xlu0 %v371
          %v373 = vpop.xlane.xlu0 %372
          %v374 = vrot.slane %v373, 4
          %v375 = vadd.f32 %v373, %v374
          %v376 = vrot.slane %v375, 2
          %v377 = vadd.f32 %v375, %v376
          %v378 = vrot.slane %v377, 1
          %v379 = vadd.f32 %v377, %v378
          %s380 = vtos %v379
          %v381 = vstv %s380
          %vm382 = vcmask 0
          %383 = vst.msk [vmem:[#allocation3] sm:$0x1] %vm382, %v381
          %384 = vst.msk [vmem:[#allocation4] sm:$0x1] %vm382, 0.0
          %385 = vst.msk [vmem:[#allocation5] sm:$0x1] %vm382, 0.0
        $region56: #{tpu_custom_call.1} parent=39 // pred_fallthru
          _
        %s386 = sld [smem:[#allocation6]]
        %s387 = smul.u32 %s22, 64
        %v388 = vlaneseq
        %v389 = vshrl.u32 %v388, 7
        %v390 = vadd.s32 %v389, 8
        %v391 = vadd.s32 %v389, 16
        %v392 = vadd.s32 %v389, 24
        %v393 = vadd.s32 %v389, 32
        %v394 = vadd.s32 %v389, 40
        %v395 = vadd.s32 %v389, 48
        %v396 = vadd.s32 %v389, 56
        %v397 = vstv %s387
        %v398 = vadd.s32 %v397, %v389
        %v399 = vadd.s32 %v397, %v390
        %v400 = vadd.s32 %v397, %v391
        %v401 = vadd.s32 %v397, %v392
        %v402 = vadd.s32 %v397, %v393
        %v403 = vadd.s32 %v397, %v394
        %v404 = vadd.s32 %v397, %v395
        %v405 = vadd.s32 %v397, %v396
        %v406 = vld [vmem:[%s279] sm:$0xff]
        %v407 = vld [vmem:[%s279 + $0x8] sm:$0xff]
        %v408 = vld [vmem:[%s279 + $0x10] sm:$0xff]
        %v409 = vld [vmem:[%s279 + $0x18] sm:$0xff]
        %v410 = vld [vmem:[%s279 + $0x20] sm:$0xff]
        %v411 = vld [vmem:[%s279 + $0x28] sm:$0xff]
        %v412 = vld [vmem:[%s279 + $0x30] sm:$0xff]
        %v413 = vld [vmem:[%s279 + $0x38] sm:$0xff]
        %v414 = vstv %s386
        %v415 = vsub.f32 %v406, %v414
        %v416 = vsub.f32 %v407, %v414
        %v417 = vsub.f32 %v408, %v414
        %v418 = vsub.f32 %v409, %v414
        %v419 = vsub.f32 %v410, %v414
        %v420 = vsub.f32 %v411, %v414
        %v421 = vsub.f32 %v412, %v414
        %v422 = vsub.f32 %v413, %v414
        %v423 = vmul.f32 %v415, %v415
        %v424 = vmul.f32 %v416, %v416
        %v425 = vmul.f32 %v417, %v417
        %v426 = vmul.f32 %v418, %v418
        %v427 = vmul.f32 %v419, %v419
        %v428 = vmul.f32 %v420, %v420
        %v429 = vmul.f32 %v421, %v421
        %v430 = vmul.f32 %v422, %v422
        %v431 = vadd.f32 %v423, 1.0
        %v432 = vadd.f32 %v424, 1.0
        %v433 = vadd.f32 %v425, 1.0
        %v434 = vadd.f32 %v426, 1.0
        %v435 = vadd.f32 %v427, 1.0
        %v436 = vadd.f32 %v428, 1.0
        %v437 = vadd.f32 %v429, 1.0
        %v438 = vadd.f32 %v430, 1.0
        %v439 = vrcp.pop %v431
        %v440 = vmul.f32 1.0, %v439
        %v441 = vrcp.pop %v432
        %v442 = vmul.f32 1.0, %v441
        %v443 = vrcp.pop %v433
        %v444 = vmul.f32 1.0, %v443
        %v445 = vrcp.pop %v434
        %v446 = vmul.f32 1.0, %v445
        %v447 = vrcp.pop %v435
        %v448 = vmul.f32 1.0, %v447
        %v449 = vrcp.pop %v436
        %v450 = vmul.f32 1.0, %v449
        %v451 = vrcp.pop %v437
        %v452 = vmul.f32 1.0, %v451
        %v453 = vrcp.pop %v438
        %v454 = vmul.f32 1.0, %v453
        %s455 = sld [smem:[#allocation10]]
        %v456 = vstv %s455
        %vm457 = vcmp.lt.s32.totalorder %v398, %v456
        %vm458 = vcmp.lt.s32.totalorder %v399, %v456
        %vm459 = vcmp.lt.s32.totalorder %v400, %v456
        %vm460 = vcmp.lt.s32.totalorder %v401, %v456
        %vm461 = vcmp.lt.s32.totalorder %v402, %v456
        %vm462 = vcmp.lt.s32.totalorder %v403, %v456
        %vm463 = vcmp.lt.s32.totalorder %v404, %v456
        %vm464 = vcmp.lt.s32.totalorder %v405, %v456
        %v465 = vsel %vm457, %v440, 0.0
        %v466 = vsel %vm458, %v442, 0.0
        %v467 = vsel %vm459, %v444, 0.0
        %v468 = vsel %vm460, %v446, 0.0
        %v469 = vsel %vm461, %v448, 0.0
        %v470 = vsel %vm462, %v450, 0.0
        %v471 = vsel %vm463, %v452, 0.0
        %v472 = vsel %vm464, %v454, 0.0
        %v473 = vld [vmem:[%s247] sm:$0xff]
        %v474 = vld [vmem:[%s247 + $0x8] sm:$0xff]
        %v475 = vld [vmem:[%s247 + $0x10] sm:$0xff]
        %v476 = vld [vmem:[%s247 + $0x18] sm:$0xff]
        %v477 = vld [vmem:[%s247 + $0x20] sm:$0xff]
        %v478 = vld [vmem:[%s247 + $0x28] sm:$0xff]
        %v479 = vld [vmem:[%s247 + $0x30] sm:$0xff]
        %v480 = vld [vmem:[%s247 + $0x38] sm:$0xff]
        %v481 = vld [vmem:[%s247 + $0x40] sm:$0xff]
        %v482 = vld [vmem:[%s247 + $0x48] sm:$0xff]
        %v483 = vld [vmem:[%s247 + $0x50] sm:$0xff]
        %v484 = vld [vmem:[%s247 + $0x58] sm:$0xff]
        %v485 = vld [vmem:[%s247 + $0x60] sm:$0xff]
        %v486 = vld [vmem:[%s247 + $0x68] sm:$0xff]
        %v487 = vld [vmem:[%s247 + $0x70] sm:$0xff]
        %v488 = vld [vmem:[%s247 + $0x78] sm:$0xff]
        %v489 = vunpack.c.l.bf16 %v473
        %v490 = vunpack.c.h.bf16 %v473
        %v491 = vunpack.c.l.bf16 %v474
        %v492 = vunpack.c.h.bf16 %v474
        %v493 = vunpack.c.l.bf16 %v475
        %v494 = vunpack.c.h.bf16 %v475
        %v495 = vunpack.c.l.bf16 %v476
        %v496 = vunpack.c.h.bf16 %v476
        %v497 = vunpack.c.l.bf16 %v477
        %v498 = vunpack.c.h.bf16 %v477
        %v499 = vunpack.c.l.bf16 %v478
        %v500 = vunpack.c.h.bf16 %v478
        %v501 = vunpack.c.l.bf16 %v479
        %v502 = vunpack.c.h.bf16 %v479
        %v503 = vunpack.c.l.bf16 %v480
        %v504 = vunpack.c.h.bf16 %v480
        %v505 = vunpack.c.l.bf16 %v481
        %v506 = vunpack.c.h.bf16 %v481
        %v507 = vunpack.c.l.bf16 %v482
        %v508 = vunpack.c.h.bf16 %v482
        %v509 = vunpack.c.l.bf16 %v483
        %v510 = vunpack.c.h.bf16 %v483
        %v511 = vunpack.c.l.bf16 %v484
        %v512 = vunpack.c.h.bf16 %v484
        %v513 = vunpack.c.l.bf16 %v485
        %v514 = vunpack.c.h.bf16 %v485
        %v515 = vunpack.c.l.bf16 %v486
        %v516 = vunpack.c.h.bf16 %v486
        %v517 = vunpack.c.l.bf16 %v487
        %v518 = vunpack.c.h.bf16 %v487
        %v519 = vunpack.c.l.bf16 %v488
        %v520 = vunpack.c.h.bf16 %v488
        %v521 = vld [vmem:[#allocation2] sm:$0xf]
        %v523 = vlaneseq
        %v524 = vshrl.u32 %v523, 7
        %v525 = vsub.s32 0, %v524
        %v526 = vrot.slane %v521, %v525
        %v527 = vlaneseq
        %v528 = vshrl.u32 %v527, 7
        %v529 = vsub.s32 1, %v528
        %v530 = vrot.slane %v521, %v529
        %v531 = vlaneseq
        %v532 = vshrl.u32 %v531, 7
        %v533 = vsub.s32 2, %v532
        %v534 = vrot.slane %v521, %v533
        %v535 = vlaneseq
        %v536 = vshrl.u32 %v535, 7
        %v537 = vsub.s32 3, %v536
        %v538 = vrot.slane %v521, %v537
        %v543 = vmul.f32 %v489, %v526
        %v544 = vmul.f32 %v490, %v530
        %v545 = vmul.f32 %v491, %v534
        %v546 = vmul.f32 %v492, %v538
        %v547 = vmul.f32 %v493, %v526
        %v548 = vmul.f32 %v494, %v530
        %v549 = vmul.f32 %v495, %v534
        %v550 = vmul.f32 %v496, %v538
        %v551 = vmul.f32 %v497, %v526
        %v552 = vmul.f32 %v498, %v530
        %v553 = vmul.f32 %v499, %v534
        %v554 = vmul.f32 %v500, %v538
        %v555 = vmul.f32 %v501, %v526
        %v556 = vmul.f32 %v502, %v530
        %v557 = vmul.f32 %v503, %v534
        %v558 = vmul.f32 %v504, %v538
        %v559 = vmul.f32 %v505, %v526
        %v560 = vmul.f32 %v506, %v530
        %v561 = vmul.f32 %v507, %v534
        %v562 = vmul.f32 %v508, %v538
        %v563 = vmul.f32 %v509, %v526
        %v564 = vmul.f32 %v510, %v530
        %v565 = vmul.f32 %v511, %v534
        %v566 = vmul.f32 %v512, %v538
        %v567 = vmul.f32 %v513, %v526
        %v568 = vmul.f32 %v514, %v530
        %v569 = vmul.f32 %v515, %v534
        %v570 = vmul.f32 %v516, %v538
        %v571 = vmul.f32 %v517, %v526
        %v572 = vmul.f32 %v518, %v530
        %v573 = vmul.f32 %v519, %v534
        %v574 = vmul.f32 %v520, %v538
        %v575 = vadd.f32 %v543, %v544
        %v576 = vadd.f32 %v575, %v545
        %v577 = vadd.f32 %v576, %v546
        %578 = vadd.xlane.f32.xlu0 %v577
        %v579 = vpop.xlane.xlu0 %578
        %v580 = vadd.f32 %v547, %v548
        %v581 = vadd.f32 %v580, %v549
        %v582 = vadd.f32 %v581, %v550
        %583 = vadd.xlane.f32.xlu0 %v582
        %v584 = vpop.xlane.xlu0 %583
        %v585 = vadd.f32 %v551, %v552
        %v586 = vadd.f32 %v585, %v553
        %v587 = vadd.f32 %v586, %v554
        %588 = vadd.xlane.f32.xlu0 %v587
        %v589 = vpop.xlane.xlu0 %588
        %v590 = vadd.f32 %v555, %v556
        %v591 = vadd.f32 %v590, %v557
        %v592 = vadd.f32 %v591, %v558
        %593 = vadd.xlane.f32.xlu0 %v592
        %v594 = vpop.xlane.xlu0 %593
        %v595 = vadd.f32 %v559, %v560
        %v596 = vadd.f32 %v595, %v561
        %v597 = vadd.f32 %v596, %v562
        %598 = vadd.xlane.f32.xlu0 %v597
        %v599 = vpop.xlane.xlu0 %598
        %v600 = vadd.f32 %v563, %v564
        %v601 = vadd.f32 %v600, %v565
        %v602 = vadd.f32 %v601, %v566
        %603 = vadd.xlane.f32.xlu0 %v602
        %v604 = vpop.xlane.xlu0 %603
        %v605 = vadd.f32 %v567, %v568
        %v606 = vadd.f32 %v605, %v569
        %v607 = vadd.f32 %v606, %v570
        %608 = vadd.xlane.f32.xlu0 %v607
        %v609 = vpop.xlane.xlu0 %608
        %v610 = vadd.f32 %v571, %v572
        %v611 = vadd.f32 %v610, %v573
        %v612 = vadd.f32 %v611, %v574
        %613 = vadd.xlane.f32.xlu0 %v612
        %v614 = vpop.xlane.xlu0 %613
        %v615 = vld [vmem:[#allocation4] sm:$0x1]
        %v616 = vmul.f32 %v579, %v465
        %v617 = vmul.f32 %v584, %v466
        %v618 = vmul.f32 %v589, %v467
        %v619 = vmul.f32 %v594, %v468
        %v620 = vmul.f32 %v599, %v469
        %v621 = vmul.f32 %v604, %v470
        %v622 = vmul.f32 %v609, %v471
        %v623 = vmul.f32 %v614, %v472
        %vm624 = vcmask 7168
        %v625 = vsel %vm624, %v616, 0.0
        %v626 = vsel %vm624, %v617, 0.0
        %v627 = vadd.f32 %v625, %v626
        %v628 = vsel %vm624, %v618, 0.0
        %v629 = vadd.f32 %v627, %v628
        %v630 = vsel %vm624, %v619, 0.0
        %v631 = vadd.f32 %v629, %v630
        %v632 = vsel %vm624, %v620, 0.0
        %v633 = vadd.f32 %v631, %v632
        %v634 = vsel %vm624, %v621, 0.0
        %v635 = vadd.f32 %v633, %v634
        %v636 = vsel %vm624, %v622, 0.0
        %v637 = vadd.f32 %v635, %v636
        %v638 = vsel %vm624, %v623, 0.0
        %v639 = vadd.f32 %v637, %v638
        %640 = vadd.xlane.f32.xlu0 %v639
        %v641 = vpop.xlane.xlu0 %640
        %v642 = vrot.slane %v641, 4
        %v643 = vadd.f32 %v641, %v642
        %v644 = vrot.slane %v643, 2
        %v645 = vadd.f32 %v643, %v644
        %v646 = vrot.slane %v645, 1
        %v647 = vadd.f32 %v645, %v646
        %s648 = vtos %v647
        %v649 = vstv %s648
        %v650 = vadd.f32 %v615, %v649
        %vm651 = vcmask 0
        %652 = vst.msk [vmem:[#allocation4] sm:$0x1] %vm651, %v650
        %v653 = vld [vmem:[#allocation5] sm:$0x1]
        %v654 = vsel %vm624, %v465, 0.0
        %v655 = vsel %vm624, %v466, 0.0
        %v656 = vadd.f32 %v654, %v655
        %v657 = vsel %vm624, %v467, 0.0
        %v658 = vadd.f32 %v656, %v657
        %v659 = vsel %vm624, %v468, 0.0
        %v660 = vadd.f32 %v658, %v659
        %v661 = vsel %vm624, %v469, 0.0
        %v662 = vadd.f32 %v660, %v661
        %v663 = vsel %vm624, %v470, 0.0
        %v664 = vadd.f32 %v662, %v663
        %v665 = vsel %vm624, %v471, 0.0
        %v666 = vadd.f32 %v664, %v665
        %v667 = vsel %vm624, %v472, 0.0
        %v668 = vadd.f32 %v666, %v667
        %669 = vadd.xlane.f32.xlu0 %v668
        %v670 = vpop.xlane.xlu0 %669
        %v671 = vrot.slane %v670, 4
        %v672 = vadd.f32 %v670, %v671
        %v673 = vrot.slane %v672, 2
        %v674 = vadd.f32 %v672, %v673
        %v675 = vrot.slane %v674, 1
        %v676 = vadd.f32 %v674, %v675
        %s677 = vtos %v676
        %v678 = vstv %s677
        %v679 = vadd.f32 %v653, %v678
        %680 = vst.msk [vmem:[#allocation5] sm:$0x1] %vm651, %v679
        %p681 = scmp.eq.s32.totalorder %s22, 3
        // Predicated region
        $region57: #{tpu_custom_call.1} parent=39 // pred_check
          %p682 = pneg %p681
        $region58: #{tpu_custom_call.1} parent=39 // pred_check_branch
          %684 = sbr.rel (%p682) target = $region60
        $region59: #{tpu_custom_call.1} parent=39 // pred_region
          %v685 = vld [vmem:[#allocation4] sm:$0x1]
          %v686 = vld [vmem:[#allocation5] sm:$0x1]
          %v687 = vld [vmem:[#allocation3] sm:$0x1]
          %v688 = vmul.f32 %v686, %v687
          %v689 = vrcp.pop %v688
          %v690 = vmul.f32 %v685, %v689
          %691 = vst.msk [vmem:[#allocation13] sm:$0x1] %vm651, %v690
        $region60: #{tpu_custom_call.1} parent=39 // pred_fallthru
          _
        // Predicated region
        $region61: #{tpu_custom_call.1} parent=39 // pred_check
          %p692 = pneg %p150
        $region62: #{tpu_custom_call.1} parent=39 // pred_check_branch
          %694 = sbr.rel (%p692) target = $region64
        $region63: #{tpu_custom_call.1} parent=39 // pred_region
          %s696 = ssub.s32 16, 16
          %697 = vsyncadd [#allocation8], %s696
          %s699 = sshll.u32 [#allocation13], 4
          %s700 = int_to_ptr.vmem [resolvable:$true] %s699
          %702 = dma.vmem_to_hbm [thread:$0]  %s700, 16, %s5, [#allocation8]
        $region64: #{tpu_custom_call.1} parent=39 // pred_fallthru
          _
        // Predicated region
        $region65: #{tpu_custom_call.1} parent=39 // pred_check
          %p703 = pneg %p150
        $region66: #{tpu_custom_call.1} parent=39 // pred_check_branch
          %705 = sbr.rel (%p703) target = $region68
        $region67: #{tpu_custom_call.1} parent=39 // pred_region
          %706 = dma.done [#allocation8], 16
        $region68: #{tpu_custom_call.1} parent=39 // pred_fallthru
          _
      $region40: #{tpu_custom_call.1} parent=5 // pred_fallthru
        _
      %p707 = scmp.le.s32.totalorder 2, %s17
      // Predicated region
      $region69: #{tpu_custom_call.1} parent=5 // pred_check
        %p708 = pneg %p707
      $region70: #{tpu_custom_call.1} parent=5 // pred_check_branch
        %710 = sbr.rel (%p708) target = $region72
      $region71: #{tpu_custom_call.1} parent=5 // pred_region
        %s711 = ssub.s32 %s17, 2
      $region72: #{tpu_custom_call.1} parent=5 // pred_fallthru
        _
    $region6: #{tpu_custom_call.1} parent=1 // loop_footer
      %s21 = sadd.s32 1, %s17
    $region7: #{tpu_custom_call.1} parent=1 // loop_footer_branch
      %16 = sbr.rel target = $region3
    $region8: #{tpu_custom_call.1} parent=1 // loop_exit
      _
    %712 = vsyncpa [#allocation7], 1
    %s713 = scalar_lea.sflag [#allocation7], 1
    %714 = vsyncpa %s713, 1
    %715 = vsyncpa [#allocation8], 1
    %s716 = scalar_lea.sflag [#allocation8], 1
    %717 = vsyncpa %s716, 1
    %718 = vsyncpa [#allocation9], 1
    %s719 = scalar_lea.sflag [#allocation9], 1
    %720 = vsyncpa %s719, 1
    %721 = vsyncpa [#allocation11], 1

</llo_original>
